<compile_context>
chip_gen: v6e
topology: v6e:2x2x1
jax: 0.10.0
libtpu: 0.0.40
codegen_flags: <defaults>
</compile_context>

<pallas_src>
import functools
import math

import jax
import jax.numpy as jnp
from jax.experimental import pallas as pl
from jax.experimental.pallas import tpu as pltpu

PI = 3.1415927410125732  # f32(pi), matches the constant in the PyTorch module


def _round_up(n, m):
    return ((n + m - 1) // m) * m


def _pos_map_kernel(x_ref, o_ref, *, L, scale, exact):
    # x_ref: (tile_r, D) block in VMEM; o_ref: (tile_r, D*(2L+1)) block in VMEM.
    x = x_ref[...].astype(jnp.float32)
    inv_scale = 1.0 / scale

    # Band 0: reference computes (x*scale)/scale; folded to x (exact up to ULP).
    bands = [x]

    # Base octave via 2 transcendentals; higher octaves via the double-angle
    # recurrence (s' = 2sc, c' = 1 - 2s^2): ~4 VPU ops per extra band instead
    # of two full range-reduction + polynomial sin/cos sequences.
    s = jnp.sin(x * (PI * scale))
    c = jnp.cos(x * (PI * scale))
    for i in range(L):
        if i > 0:
            if exact:
                freq = (2.0 ** i) * PI * scale    # Python float, folded at trace time
                s, c = jnp.sin(x * freq), jnp.cos(x * freq)
            else:
                s, c = 2.0 * s * c, 1.0 - 2.0 * s * s
        if scale != 1.0:
            bands.append(s * inv_scale)
            bands.append(c * inv_scale)
        else:
            bands.append(s)
            bands.append(c)

    # Pack all bands along lanes before the store: the (tile_r, (2L+1)*D) block
    # is then written with unmasked full-vreg stores for every complete
    # 128-lane column (only the trailing partial column is masked), instead of
    # 2L+1 masked D-lane stores. The lane placement runs on otherwise-idle
    # XLU/select slots.
    o_ref[...] = jnp.concatenate(bands, axis=-1).astype(o_ref.dtype)


def positional_mapping(x, L=5, scale=1.0, *, tile_rows=2048,
                       vmem_block_budget=16 * 1024 * 1024, exact=False):
    """JAX/Pallas equivalent of PositionalMapping.forward (features-last)."""
    if L == 0:
        return x * scale  # matches PyTorch: returns scaled x, no trailing division

    orig_shape = x.shape
    D = orig_shape[-1]
    rows = math.prod(orig_shape[:-1]) if len(orig_shape) > 1 else 1
    out_dim = D * (2 * L + 1)
    x2d = x.reshape(rows, D)

    itemsize = x2d.dtype.itemsize
    sub = {4: 8, 2: 16, 1: 32}.get(itemsize, 8)   # min sublane tile per dtype

    # Cap tile_r so double-buffered (in + out) blocks stay within budget,
    # accounting for the (2L+1)*D-wide output block.
    bytes_per_row = (D + out_dim) * itemsize
    vmem_cap = max(sub, (vmem_block_budget // (2 * bytes_per_row)) // sub * sub)
    tile_cap = max(sub, min(tile_rows, vmem_cap))

    # Padding-aware tile size: split rows into roughly equal tiles (at most
    # sub-1 wasted rows in the ragged last block), with >=2 grid steps when
    # possible so both v7x TensorCores get work. No host-side pad/slice.
    min_steps = 2 if rows >= 2 * sub else 1
    n_steps = max(min_steps, pl.cdiv(rows, tile_cap))
    tile_r = min(_round_up(pl.cdiv(rows, n_steps), sub), tile_cap)
    if tile_r >= rows:
        tile_r = rows  # single full-extent block (satisfies the (8,128) rule)
    grid = (pl.cdiv(rows, tile_r),)

    n_elem = rows * D
    cost = pl.CostEstimate(
        flops=n_elem * (4 * L + 2),
        transcendentals=n_elem * 2,
        bytes_accessed=n_elem * itemsize * (2 * L + 2),  # read 1x + write (2L+1)x
    )

    kernel = functools.partial(_pos_map_kernel, L=L, scale=float(scale), exact=exact)
    out2d = pl.pallas_call(
        kernel,
        out_shape=jax.ShapeDtypeStruct((rows, out_dim), x.dtype),
        grid=grid,
        in_specs=[pl.BlockSpec((tile_r, D), lambda i: (i, 0))],
        out_specs=pl.BlockSpec((tile_r, out_dim), lambda i: (i, 0)),
        compiler_params=pltpu.CompilerParams(
            dimension_semantics=("parallel",),
            vmem_limit_bytes=32 * 1024 * 1024,
        ),
        cost_estimate=cost,
    )(x2d)

    return out2d.reshape(*orig_shape[:-1], out_dim)


def _reference(x, L=5, scale=1.0):
    x = x * scale
    if L == 0:
        return x
    h = [x]
    for i in range(L):
        h.append(jnp.sin(2 ** i * PI * x))
        h.append(jnp.cos(2 ** i * PI * x))
    return jnp.concatenate(h, axis=-1) / scale


if __name__ == "__main__":
    L = 5
    # Double-angle recurrence drifts a few ULPs per octave and rounds large
    # angles in a different order than the reference; 5e-4 gives headroom.
    TOL = 5e-4

    # batch=2, seq=8, hidden=32  (features-last layout)
    x = jax.random.normal(jax.random.PRNGKey(0), (2, 8, 32), dtype=jnp.float32)
    out = jax.block_until_ready(positional_mapping(x, L=L, scale=1.0))
    ref = _reference(x, L=L, scale=1.0)
    assert out.shape == (2, 8, 32 * (2 * L + 1)), out.shape
    err = float(jnp.max(jnp.abs(out - ref)))
    assert err < TOL, f"scale=1 mismatch: max err {err}"

    # rows not a multiple of the sublane tile + non-unit scale
    x2 = jax.random.normal(jax.random.PRNGKey(1), (3, 5, 32), dtype=jnp.float32)
    out2 = jax.block_until_ready(positional_mapping(x2, L=L, scale=2.0))
    err2 = float(jnp.max(jnp.abs(out2 - _reference(x2, L=L, scale=2.0))))
    assert err2 < TOL, f"scale=2 mismatch: max err {err2}"

    # rows=35 with tile_r=24 -> exercises the ragged (clipped) last block
    x3 = jax.random.normal(jax.random.PRNGKey(2), (5, 7, 32), dtype=jnp.float32)
    out3 = jax.block_until_ready(positional_mapping(x3, L=L, scale=1.0))
    err3 = float(jnp.max(jnp.abs(out3 - _reference(x3, L=L, scale=1.0))))
    assert err3 < TOL, f"ragged-block mismatch: max err {err3}"

    print("KERNEL_OK")
</pallas_src>

<mosaic_0001>
module attributes {stable_mosaic.version = 11 : i64} {
  func.func @_pos_map_kernel(%arg0: i32, %arg1: memref<8x32xf32, #tpu.memory_space<vmem>>, %arg2: memref<8x352xf32, #tpu.memory_space<vmem>>) attributes {dimension_semantics = [#tpu.dimension_semantics<parallel>], iteration_bounds = array<i64: 2>, scalar_prefetch = 0 : i64, scratch_operands = 0 : i64, tpu.core_type = #tpu.core_type<tc>, window_params = [{transform_indices = @transform_0, window_bounds = array<i64: 8, 32>}, {transform_indices = @transform_1, window_bounds = array<i64: 8, 352>}]} {
    %c0 = arith.constant 0 : index
    %c0_0 = arith.constant 0 : index
    %0 = vector.load %arg1[%c0, %c0_0] : memref<8x32xf32, #tpu.memory_space<vmem>>, vector<8x32xf32>
    %cst = arith.constant 3.14159274 : f32
    %1 = vector.broadcast %cst : f32 to vector<8x32xf32>
    %2 = arith.mulf %0, %1 : vector<8x32xf32>
    %3 = math.sin %2 : vector<8x32xf32>
    %cst_1 = arith.constant 3.14159274 : f32
    %4 = vector.broadcast %cst_1 : f32 to vector<8x32xf32>
    %5 = arith.mulf %0, %4 : vector<8x32xf32>
    %6 = math.cos %5 : vector<8x32xf32>
    %cst_2 = arith.constant 2.000000e+00 : f32
    %7 = vector.broadcast %cst_2 : f32 to vector<8x32xf32>
    %8 = arith.mulf %7, %3 : vector<8x32xf32>
    %9 = arith.mulf %8, %6 : vector<8x32xf32>
    %cst_3 = arith.constant 2.000000e+00 : f32
    %10 = vector.broadcast %cst_3 : f32 to vector<8x32xf32>
    %11 = arith.mulf %10, %3 : vector<8x32xf32>
    %12 = arith.mulf %11, %3 : vector<8x32xf32>
    %cst_4 = arith.constant 1.000000e+00 : f32
    %13 = vector.broadcast %cst_4 : f32 to vector<8x32xf32>
    %14 = arith.subf %13, %12 : vector<8x32xf32>
    %cst_5 = arith.constant 2.000000e+00 : f32
    %15 = vector.broadcast %cst_5 : f32 to vector<8x32xf32>
    %16 = arith.mulf %15, %9 : vector<8x32xf32>
    %17 = arith.mulf %16, %14 : vector<8x32xf32>
    %cst_6 = arith.constant 2.000000e+00 : f32
    %18 = vector.broadcast %cst_6 : f32 to vector<8x32xf32>
    %19 = arith.mulf %18, %9 : vector<8x32xf32>
    %20 = arith.mulf %19, %9 : vector<8x32xf32>
    %cst_7 = arith.constant 1.000000e+00 : f32
    %21 = vector.broadcast %cst_7 : f32 to vector<8x32xf32>
    %22 = arith.subf %21, %20 : vector<8x32xf32>
    %cst_8 = arith.constant 2.000000e+00 : f32
    %23 = vector.broadcast %cst_8 : f32 to vector<8x32xf32>
    %24 = arith.mulf %23, %17 : vector<8x32xf32>
    %25 = arith.mulf %24, %22 : vector<8x32xf32>
    %cst_9 = arith.constant 2.000000e+00 : f32
    %26 = vector.broadcast %cst_9 : f32 to vector<8x32xf32>
    %27 = arith.mulf %26, %17 : vector<8x32xf32>
    %28 = arith.mulf %27, %17 : vector<8x32xf32>
    %cst_10 = arith.constant 1.000000e+00 : f32
    %29 = vector.broadcast %cst_10 : f32 to vector<8x32xf32>
    %30 = arith.subf %29, %28 : vector<8x32xf32>
    %cst_11 = arith.constant 2.000000e+00 : f32
    %31 = vector.broadcast %cst_11 : f32 to vector<8x32xf32>
    %32 = arith.mulf %31, %25 : vector<8x32xf32>
    %33 = arith.mulf %32, %30 : vector<8x32xf32>
    %cst_12 = arith.constant 2.000000e+00 : f32
    %34 = vector.broadcast %cst_12 : f32 to vector<8x32xf32>
    %35 = arith.mulf %34, %25 : vector<8x32xf32>
    %36 = arith.mulf %35, %25 : vector<8x32xf32>
    %cst_13 = arith.constant 1.000000e+00 : f32
    %37 = vector.broadcast %cst_13 : f32 to vector<8x32xf32>
    %38 = arith.subf %37, %36 : vector<8x32xf32>
    %39 = tpu.concatenate %0, %3, %6, %9, %14, %17, %22, %25, %30, %33, %38 in 1 : vector<8x32xf32>, vector<8x32xf32>, vector<8x32xf32>, vector<8x32xf32>, vector<8x32xf32>, vector<8x32xf32>, vector<8x32xf32>, vector<8x32xf32>, vector<8x32xf32>, vector<8x32xf32>, vector<8x32xf32> -> vector<8x352xf32>
    %c0_14 = arith.constant 0 : index
    %c0_15 = arith.constant 0 : index
    %40 = vector.load %arg2[%c0_14, %c0_15] : memref<8x352xf32, #tpu.memory_space<vmem>>, vector<8x352xf32>
    tpu.vector_store %arg2[%c0_14, %c0_15], %39 {strides = array<i32>} : memref<8x352xf32, #tpu.memory_space<vmem>>, vector<8x352xf32>,
    return
  }
  func.func @transform_0(%arg0: i32) -> (i32, i32) {
    %c0_i32 = arith.constant 0 : i32
    %c0_i32_0 = arith.constant 0 : i32
    return %arg0, %c0_i32 : i32, i32
  }
  func.func @transform_1(%arg0: i32) -> (i32, i32) {
    %c0_i32 = arith.constant 0 : i32
    %c0_i32_0 = arith.constant 0 : i32
    return %arg0, %c0_i32 : i32, i32
  }
}

</mosaic_0001>

<llo_original>
// kernel: tpu_custom_call.1
$region0: #{tpu_custom_call.1}
  #allocation0 [shape = 'u32[]', space=smem, size = 0x4, offset = 0x4, fixed_abs, tag = 'smem constant byte address 0x4 - core index']
  #allocation1 [shape = 'u32[144,128]{1,0:T(1,128)}', space=vmem, size = 0x12000, scoped, tag = 'internal scratch']
  %s0 = inlined_call_operand.hbm [shape: f32[16,32], index: 0, kind: input, shape index: {}]
  %s1 = inlined_call_operand.hbm [shape: f32[16,352], index: 1, kind: output, shape index: {}]
  %s2 = sld [smem:[#allocation0]]
  $region41: #{tpu_custom_call.1} parent=0
    _
  %s4 = ssub.s32 1, %s2
  %s5 = scalar_select 0, %s4, %s2
  $region1: #{tpu_custom_call.1} parent=0
    #allocation2 [shape = 'u8[8192]{0}', space=vmem, size = 0x2000, scoped, tag = 'input window, operand 0']
    #allocation3 [shape = 's32[2]{0}', space=sflag, size = 0x8, scoped, tag = 'scoped memory for tpu_custom_call.1']
    #allocation4 [shape = 's32[2]{0}', space=sflag, size = 0x8, scoped, tag = 'scoped memory for tpu_custom_call.1']
    #allocation5 [shape = 'u8[24576]{0}', space=vmem, size = 0x6000, scoped, tag = 'output window, operand 0']
    %6 = vsyncpa [#allocation3], 0
    %s7 = scalar_lea.sflag [#allocation3], 1
    %8 = vsyncpa %s7, 0
    %9 = vsyncpa [#allocation4], 0
    %s10 = scalar_lea.sflag [#allocation4], 1
    %11 = vsyncpa %s10, 0
    loop: start=0, step=1, limit=4
    $region2: #{tpu_custom_call.1} parent=1 // loop_pre_header
      _
    $region3: #{tpu_custom_call.1} parent=1 // loop_header
      %s13 = sphi 0, %s17
      %p14 = scmp.ge.s32.totalorder %s13, 4
      %s23 = sphi 0, %s25
      %s26 = sphi 0, %s23
      %s27 = sphi 0, %s26
      %s43 = sphi 0, %s27
      %s49 = sphi 0, %s51
      %s52 = sphi 0, %s49
      %s53 = sphi 0, %s52
      %s69 = sphi 0, %s53
    $region4: #{tpu_custom_call.1} parent=1 // loop_header_branch
      %16 = sbr.rel (%p14) target = $region8
    $region5: #{tpu_custom_call.1} parent=1 // loop_body
      %s18 = ssub.s32 %s13, 1
      %s19 = ssub.s32 %s13, 2
      %s20 = sadd.s32 %s13, 1
      %s21 = ssub.s32 %s13, %s20
      %p22 = scmp.eq.s32.totalorder %s21, 0
      %s24 = sadd.s32 %s23, 1
      %s25 = scalar_select %p22, %s23, %s24
      %p28 = pneg %p22
      %p29 = scmp.eq.s32.totalorder %s13, 1
      %p30 = por %p28, %p29
      %p31 = scmp.ne.s32.totalorder %s23, %s26
      %p32 = scmp.eq.s32.totalorder %s13, 0
      %p33 = por %p31, %p32
      %p34 = scmp.ne.s32.totalorder %s23, %s26
      %p35 = scmp.eq.s32.totalorder %s18, 1
      %p36 = por %p34, %p35
      %p37 = scmp.ne.s32.totalorder %s26, %s27
      %p38 = scmp.eq.s32.totalorder %s18, 0
      %p39 = por %p37, %p38
      %p40 = scmp.ne.s32.totalorder %s26, %s27
      %p41 = scmp.eq.s32.totalorder %s19, 1
      %p42 = por %p40, %p41
      %p44 = scmp.ne.s32.totalorder %s27, %s43
      %p45 = scmp.eq.s32.totalorder %s19, 0
      %p46 = por %p44, %p45
      %s47 = ssub.s32 %s13, %s20
      %p48 = scmp.eq.s32.totalorder %s47, 0
      %s50 = sadd.s32 %s49, 1
      %s51 = scalar_select %p48, %s49, %s50
      %p54 = pneg %p48
      %p55 = scmp.eq.s32.totalorder %s13, 1
      %p56 = por %p54, %p55
      %p57 = scmp.ne.s32.totalorder %s49, %s52
      %p58 = scmp.eq.s32.totalorder %s13, 0
      %p59 = por %p57, %p58
      %p60 = scmp.ne.s32.totalorder %s49, %s52
      %p61 = scmp.eq.s32.totalorder %s18, 1
      %p62 = por %p60, %p61
      %p63 = scmp.ne.s32.totalorder %s52, %s53
      %p64 = scmp.eq.s32.totalorder %s18, 0
      %p65 = por %p63, %p64
      %p66 = scmp.ne.s32.totalorder %s52, %s53
      %p67 = scmp.eq.s32.totalorder %s19, 1
      %p68 = por %p66, %p67
      %p70 = scmp.ne.s32.totalorder %s53, %s69
      %p71 = scmp.eq.s32.totalorder %s19, 0
      %p72 = por %p70, %p71
      %p73 = scmp.le.s32.totalorder 1, %s13
      %p74 = scmp.lt.s32.totalorder %s13, 3
      %p75 = pnand %p73, %p74
      %p76 = pneg %p75
      // Predicated region
      $region9: #{tpu_custom_call.1} parent=5 // pred_check
        _
      $region10: #{tpu_custom_call.1} parent=5 // pred_check_branch
        %78 = sbr.rel (%p75) target = $region12
      $region11: #{tpu_custom_call.1} parent=5 // pred_region
        %s79 = ssub.s32 %s13, 1
      $region12: #{tpu_custom_call.1} parent=5 // pred_fallthru
        _
      %p80 = scmp.lt.s32.totalorder %s13, 2
      // Predicated region
      $region13: #{tpu_custom_call.1} parent=5 // pred_check
        %p81 = pneg %p80
      $region14: #{tpu_custom_call.1} parent=5 // pred_check_branch
        %83 = sbr.rel (%p81) target = $region16
      $region15: #{tpu_custom_call.1} parent=5 // pred_region
        // Predicated region
        $region17: #{tpu_custom_call.1} parent=15 // pred_check
          %p84 = pneg %p33
        $region18: #{tpu_custom_call.1} parent=15 // pred_check_branch
          %86 = sbr.rel (%p84) target = $region20
        $region19: #{tpu_custom_call.1} parent=15 // pred_region
          %s87 = sand.u32 %s23, 1
          %s88 = scalar_lea.sflag [#allocation3], %s87
          %s89 = sand.u32 %s23, 1
          %s90 = smul.addr %s89, 8
          %s91 = scalar_lea.vmem [#allocation2], %s90
          %s93 = ssub.s32 128, 128
          %94 = vsyncadd %s88, %s93
          %s95 = smul.addr %s13, 128
          %s96 = scalar_lea.hbm %s0, %s95
          %s98 = sshll.u32 %s91, 4
          %s99 = int_to_ptr.vmem [resolvable:$true] %s98
          %101 = dma.hbm_to_vmem [thread:$0]  %s96, 128, %s99, %s88
        $region20: #{tpu_custom_call.1} parent=15 // pred_fallthru
          _
      $region16: #{tpu_custom_call.1} parent=5 // pred_fallthru
        _
      %p102 = scmp.le.s32.totalorder 1, %s13
      %p103 = scmp.lt.s32.totalorder %s13, 3
      %p104 = pnand %p102, %p103
      %p105 = pneg %p104
      // Predicated region
      $region21: #{tpu_custom_call.1} parent=5 // pred_check
        _
      $region22: #{tpu_custom_call.1} parent=5 // pred_check_branch
        %107 = sbr.rel (%p104) target = $region24
      $region23: #{tpu_custom_call.1} parent=5 // pred_region
        %s108 = ssub.s32 %s13, 1
        %s109 = sand.u32 %s26, 1
        %s110 = scalar_lea.sflag [#allocation3], %s109
        %s111 = sand.u32 %s26, 1
        %s112 = smul.addr %s111, 8
        %s113 = scalar_lea.vmem [#allocation2], %s112
        // Predicated region
        $region25: #{tpu_custom_call.1} parent=23 // pred_check
          %p114 = pneg %p39
        $region26: #{tpu_custom_call.1} parent=23 // pred_check_branch
          %116 = sbr.rel (%p114) target = $region28
        $region27: #{tpu_custom_call.1} parent=23 // pred_region
          %117 = dma.done %s110, 128
        $region28: #{tpu_custom_call.1} parent=23 // pred_fallthru
          _
        %s118 = sand.u32 %s26, 1
        %s119 = scalar_lea.sflag [#allocation3], %s118
        %s120 = sand.u32 %s26, 1
        %s121 = smul.addr %s120, 8
        %s122 = scalar_lea.vmem [#allocation2], %s121
        %p123 = pneg %p39
        %p124 = pneg %p36
        %p125 = pneg %p65
        %p126 = pneg %p62
        %s127 = sand.u32 %s52, 1
        %s128 = scalar_lea.sflag [#allocation4], %s127
        %s129 = sand.u32 %s52, 1
        %s130 = smul.addr %s129, 24
        %s131 = scalar_lea.vmem [#allocation5], %s130
        %v132 = vld [vmem:[%s113] sm:$0xff]
        %v133 = vmul.f32 %v132, 3.1415927
        %v134 = vand.u32 2147483647, %v133
        %vm135 = vcmp.le.f32.partialorder %v134, 0.7853982
        %vm136 = vcmp.lt.s32.totalorder %v133, 0
        %v137 = vand.u32 %v133, 2139095040
        %v138 = vshrl.u32 %v137, 23
        %v139 = vsub.s32 %v138, 127
        %v140 = vand.u32 2147483647, %v133
        %v141 = vand.u32 %v140, 8388607
        %v142 = vor.u32 %v141, 8388608
        %v143 = vsub.s32 0, %v142
        %v144 = vadd.s32 %v139, 1
        %vm145 = vcmp.gt.s32.totalorder %v144, 0
        %v146 = vsel %vm145, %v144, 0
        %v147 = vshrl.u32 %v146, 5
        %v148 = vand.u32 %v146, 31
        %v149 = vsub.s32 32, %v148
        %v150 = vshrl.u32 683565275, %v149
        %v151 = vshll.u32 683565275, %v148
        %v152 = vshrl.u32 2475754826, %v149
        %v153 = vor.u32 %v151, %v152
        %v154 = vshll.u32 2475754826, %v148
        %v155 = vshrl.u32 2131351028, %v149
        %v156 = vor.u32 %v154, %v155
        %v157 = vshll.u32 2131351028, %v148
        %v158 = vshrl.u32 2102212464, %v149
        %v159 = vor.u32 %v157, %v158
        %v160 = vshll.u32 2102212464, %v148
        %v161 = vshrl.u32 920167782, %v149
        %v162 = vor.u32 %v160, %v161
        %v163 = vshll.u32 920167782, %v148
        %v164 = vshrl.u32 1326507024, %v149
        %v165 = vor.u32 %v163, %v164
        %vm166 = vcmp.lt.s32.totalorder %v147, 1
        %vm167 = vcmp.lt.s32.totalorder %v147, 2
        %vm168 = vcmp.lt.s32.totalorder %v147, 3
        %vm169 = vcmp.lt.s32.totalorder %v147, 4
        %v170 = vsel %vm166, %v150, %v153
        %v171 = vsel %vm169, %v159, 2102212464
        %v172 = vsel %vm168, %v156, %v171
        %v173 = vsel %vm167, %v170, %v172
        %v174 = vsel %vm166, %v153, %v156
        %v175 = vsel %vm169, %v162, 920167782
        %v176 = vsel %vm168, %v159, %v175
        %v177 = vsel %vm167, %v174, %v176
        %v178 = vsel %vm166, %v156, %v159
        %v179 = vsel %vm169, %v165, 1326507024
        %v180 = vsel %vm168, %v162, %v179
        %v181 = vsel %vm167, %v178, %v180
        %v182 = vshll.u32 %v142, 8
        %v183 = vmul.u32.u64.compose %v182, %v181
        %v184 = vextract.low.u32 %v183
        %v185 = vextract.high.u32 %v183
        %v186 = vmul.u32.u64.compose %v182, %v177
        %v187 = vextract.low.u32 %v186
        %v188 = vextract.high.u32 %v186
        %v189 = vmul.u32 %v182, %v173
        %v190 = vadd.s32 %v185, %v187
        %vm191 = vc.u32 %v185, %v187
        %v192 = vadd.s32 %v188, 1
        %v193 = vsel %vm191, %v192, %v188
        %v194 = vadd.s32 %v189, %v193
        %v195 = vadd.s32 %v194, 536870912
        %v196 = vshrl.u32 %v195, 30
        %v197 = vshll.u32 %v196, 30
        %v198 = vsub.s32 %v194, %v197
        %vm199 = vcmp.lt.s32.totalorder %v198, 0
        %v200 = vsub.s32 0, %v198
        %v201 = vsel %vm199, %v200, %v198
        %v202 = vclz %v201
        %v203 = vsub.s32 %v202, 2
        %vm204 = vcmp.gt.s32.totalorder 0, %v203
        %v205 = vsel %vm204, 0, %v203
        %v206 = vsub.s32 32, %v205
        %v207 = vshll.u32 %v198, %v205
        %v208 = vshrl.u32 %v190, %v206
        %v209 = vor.u32 %v207, %v208
        %v210 = vsub.s32 4294967266, %v205
        %v211 = vadd.s32 %v210, 127
        %v212 = vshll.u32 %v211, 23
        %v213 = vor.u32 4788187, %v212
        %v214 = vand.u32 2147483647, %v213
        %v216 = vcvt.s32.f32 %v209
        %v217 = vmul.f32 %v216, %v214
        %v218 = vxor.u32 %v217, 2147483648
        %v219 = vsel %vm136, %v218, %v217
        %v220 = vsub.s32 4, %v196
        %v221 = vsel %vm136, %v220, %v196
        %v222 = vsel %vm135, %v133, %v219
        %v223 = vsel %vm135, 0, %v221
        %v224 = vcosq.f32.pop %v222
        %v225 = vsinq.f32.pop %v222
        %vm226 = vweird.f32 %v133
        %v227 = vadd.s32 %v223, 3
        %v228 = vand.u32 %v227, 3
        %vm229 = vcmp.lt.s32.totalorder %v228, 2
        %vm230 = vcmp.eq.s32.totalorder %v228, 0
        %v231 = vxor.u32 %v225, 2147483648
        %v232 = vsel %vm230, %v224, %v231
        %vm233 = vcmp.eq.s32.totalorder %v228, 2
        %v234 = vxor.u32 %v224, 2147483648
        %v235 = vsel %vm233, %v234, %v225
        %v236 = vsel %vm229, %v232, %v235
        %v237 = vsel %vm226, nan, %v236
        %v238 = vand.u32 2147483647, %v133
        %vm239 = vcmp.le.f32.partialorder %v238, 0.7853982
        %vm240 = vcmp.lt.s32.totalorder %v133, 0
        %v241 = vand.u32 %v133, 2139095040
        %v242 = vshrl.u32 %v241, 23
        %v243 = vsub.s32 %v242, 127
        %v244 = vand.u32 2147483647, %v133
        %v245 = vand.u32 %v244, 8388607
        %v246 = vor.u32 %v245, 8388608
        %v247 = vsub.s32 0, %v246
        %v248 = vadd.s32 %v243, 1
        %vm249 = vcmp.gt.s32.totalorder %v248, 0
        %v250 = vsel %vm249, %v248, 0
        %v251 = vshrl.u32 %v250, 5
        %v252 = vand.u32 %v250, 31
        %v253 = vsub.s32 32, %v252
        %v254 = vshrl.u32 683565275, %v253
        %v255 = vshll.u32 683565275, %v252
        %v256 = vshrl.u32 2475754826, %v253
        %v257 = vor.u32 %v255, %v256
        %v258 = vshll.u32 2475754826, %v252
        %v259 = vshrl.u32 2131351028, %v253
        %v260 = vor.u32 %v258, %v259
        %v261 = vshll.u32 2131351028, %v252
        %v262 = vshrl.u32 2102212464, %v253
        %v263 = vor.u32 %v261, %v262
        %v264 = vshll.u32 2102212464, %v252
        %v265 = vshrl.u32 920167782, %v253
        %v266 = vor.u32 %v264, %v265
        %v267 = vshll.u32 920167782, %v252
        %v268 = vshrl.u32 1326507024, %v253
        %v269 = vor.u32 %v267, %v268
        %vm270 = vcmp.lt.s32.totalorder %v251, 1
        %vm271 = vcmp.lt.s32.totalorder %v251, 2
        %vm272 = vcmp.lt.s32.totalorder %v251, 3
        %vm273 = vcmp.lt.s32.totalorder %v251, 4
        %v274 = vsel %vm270, %v254, %v257
        %v275 = vsel %vm273, %v263, 2102212464
        %v276 = vsel %vm272, %v260, %v275
        %v277 = vsel %vm271, %v274, %v276
        %v278 = vsel %vm270, %v257, %v260
        %v279 = vsel %vm273, %v266, 920167782
        %v280 = vsel %vm272, %v263, %v279
        %v281 = vsel %vm271, %v278, %v280
        %v282 = vsel %vm270, %v260, %v263
        %v283 = vsel %vm273, %v269, 1326507024
        %v284 = vsel %vm272, %v266, %v283
        %v285 = vsel %vm271, %v282, %v284
        %v286 = vshll.u32 %v246, 8
        %v287 = vmul.u32.u64.compose %v286, %v285
        %v288 = vextract.low.u32 %v287
        %v289 = vextract.high.u32 %v287
        %v290 = vmul.u32.u64.compose %v286, %v281
        %v291 = vextract.low.u32 %v290
        %v292 = vextract.high.u32 %v290
        %v293 = vmul.u32 %v286, %v277
        %v294 = vadd.s32 %v289, %v291
        %vm295 = vc.u32 %v289, %v291
        %v296 = vadd.s32 %v292, 1
        %v297 = vsel %vm295, %v296, %v292
        %v298 = vadd.s32 %v293, %v297
        %v299 = vadd.s32 %v298, 536870912
        %v300 = vshrl.u32 %v299, 30
        %v301 = vshll.u32 %v300, 30
        %v302 = vsub.s32 %v298, %v301
        %vm303 = vcmp.lt.s32.totalorder %v302, 0
        %v304 = vsub.s32 0, %v302
        %v305 = vsel %vm303, %v304, %v302
        %v306 = vclz %v305
        %v307 = vsub.s32 %v306, 2
        %vm308 = vcmp.gt.s32.totalorder 0, %v307
        %v309 = vsel %vm308, 0, %v307
        %v310 = vsub.s32 32, %v309
        %v311 = vshll.u32 %v302, %v309
        %v312 = vshrl.u32 %v294, %v310
        %v313 = vor.u32 %v311, %v312
        %v314 = vsub.s32 4294967266, %v309
        %v315 = vadd.s32 %v314, 127
        %v316 = vshll.u32 %v315, 23
        %v317 = vor.u32 4788187, %v316
        %v318 = vand.u32 2147483647, %v317
        %v320 = vcvt.s32.f32 %v313
        %v321 = vmul.f32 %v320, %v318
        %v322 = vxor.u32 %v321, 2147483648
        %v323 = vsel %vm240, %v322, %v321
        %v324 = vsub.s32 4, %v300
        %v325 = vsel %vm240, %v324, %v300
        %v326 = vsel %vm239, %v133, %v323
        %v327 = vsel %vm239, 0, %v325
        %v328 = vcosq.f32.pop %v326
        %v329 = vsinq.f32.pop %v326
        %vm330 = vweird.f32 %v133
        %v331 = vand.u32 %v327, 3
        %vm332 = vcmp.lt.s32.totalorder %v331, 2
        %vm333 = vcmp.eq.s32.totalorder %v331, 0
        %v334 = vxor.u32 %v329, 2147483648
        %v335 = vsel %vm333, %v328, %v334
        %vm336 = vcmp.eq.s32.totalorder %v331, 2
        %v337 = vxor.u32 %v328, 2147483648
        %v338 = vsel %vm336, %v337, %v329
        %v339 = vsel %vm332, %v335, %v338
        %v340 = vsel %vm330, nan, %v339
        %v341 = vmul.f32 %v237, 2.0
        %v342 = vmul.f32 %v341, %v340
        %v343 = vmul.f32 %v341, %v237
        %v344 = vsub.f32 1.0, %v343
        %v345 = vmul.f32 %v342, 2.0
        %v346 = vmul.f32 %v345, %v344
        %v347 = vmul.f32 %v345, %v342
        %v348 = vsub.f32 1.0, %v347
        %v349 = vmul.f32 %v346, 2.0
        %v350 = vmul.f32 %v349, %v348
        %v351 = vmul.f32 %v349, %v346
        %v352 = vsub.f32 1.0, %v351
        %v353 = vmul.f32 %v350, 2.0
        %v354 = vmul.f32 %v353, %v352
        %v355 = vmul.f32 %v353, %v350
        %v356 = vsub.f32 1.0, %v355
        %358 = vrot.lane.b32.xlu0 %v237, 32
        %v359 = vpop.permute.xlu0 %358
        %362 = vrot.lane.b32.xlu0 %v340, 64
        %v363 = vpop.permute.xlu0 %362
        %366 = vrot.lane.b32.xlu0 %v342, 96
        %v367 = vpop.permute.xlu0 %366
        %370 = vrot.lane.b32.xlu0 %v346, 32
        %v371 = vpop.permute.xlu0 %370
        %374 = vrot.lane.b32.xlu0 %v348, 64
        %v375 = vpop.permute.xlu0 %374
        %378 = vrot.lane.b32.xlu0 %v350, 96
        %v379 = vpop.permute.xlu0 %378
        %382 = vrot.lane.b32.xlu0 %v354, 32
        %v383 = vpop.permute.xlu0 %382
        %386 = vrot.lane.b32.xlu0 %v356, 64
        %v387 = vpop.permute.xlu0 %386
        %vm389 = vcmask 261120
        %v390 = vsel %vm389, %v132, %v359
        %vm391 = vcmask 523264
        %v392 = vsel %vm391, %v390, %v363
        %vm393 = vcmask 785408
        %v394 = vsel %vm393, %v392, %v367
        %v395 = vsel %vm389, %v344, %v371
        %v396 = vsel %vm391, %v395, %v375
        %v397 = vsel %vm393, %v396, %v379
        %v398 = vsel %vm389, %v352, %v383
        %v399 = vsel %vm391, %v398, %v387
        %400 = vst [vmem:[%s131] sm:$0xff] %v394
        %401 = vst [vmem:[%s131 + $0x8] sm:$0xff] %v397
        %402 = vst.msk [vmem:[%s131 + $0x10] sm:$0xff] %vm393, %v399
        %s403 = sand.u32 %s52, 1
        %s404 = scalar_lea.sflag [#allocation4], %s403
        %s405 = sand.u32 %s52, 1
        %s406 = smul.addr %s405, 24
        %s407 = scalar_lea.vmem [#allocation5], %s406
        // Predicated region
        $region29: #{tpu_custom_call.1} parent=23 // pred_check
          %p408 = pneg %p62
        $region30: #{tpu_custom_call.1} parent=23 // pred_check_branch
          %410 = sbr.rel (%p408) target = $region32
        $region31: #{tpu_custom_call.1} parent=23 // pred_region
          %s412 = ssub.s32 384, 384
          %413 = vsyncadd %s404, %s412
          %s414 = smul.addr %s18, 3
          %s415 = smul.addr %s414, 128
          %s416 = scalar_lea.hbm %s1, %s415
          %s418 = sshll.u32 %s407, 4
          %s419 = int_to_ptr.vmem [resolvable:$true] %s418
          %421 = dma.vmem_to_hbm [thread:$0]  %s419, 384, %s416, %s404
        $region32: #{tpu_custom_call.1} parent=23 // pred_fallthru
          _
      $region24: #{tpu_custom_call.1} parent=5 // pred_fallthru
        _
      %p422 = scmp.le.s32.totalorder 2, %s13
      // Predicated region
      $region33: #{tpu_custom_call.1} parent=5 // pred_check
        %p423 = pneg %p422
      $region34: #{tpu_custom_call.1} parent=5 // pred_check_branch
        %425 = sbr.rel (%p423) target = $region36
      $region35: #{tpu_custom_call.1} parent=5 // pred_region
        %s426 = ssub.s32 %s13, 2
        // Predicated region
        $region37: #{tpu_custom_call.1} parent=35 // pred_check
          %p427 = pneg %p68
        $region38: #{tpu_custom_call.1} parent=35 // pred_check_branch
          %429 = sbr.rel (%p427) target = $region40
        $region39: #{tpu_custom_call.1} parent=35 // pred_region
          %s430 = sand.u32 %s53, 1
          %s431 = scalar_lea.sflag [#allocation4], %s430
          %s432 = sand.u32 %s53, 1
          %s433 = smul.addr %s432, 24
          %s434 = scalar_lea.vmem [#allocation5], %s433
          %435 = dma.done %s431, 384
        $region40: #{tpu_custom_call.1} parent=35 // pred_fallthru
          _
      $region36: #{tpu_custom_call.1} parent=5 // pred_fallthru
        _
    $region6: #{tpu_custom_call.1} parent=1 // loop_footer
      %s17 = sadd.s32 1, %s13
    $region7: #{tpu_custom_call.1} parent=1 // loop_footer_branch
      %12 = sbr.rel target = $region3
    $region8: #{tpu_custom_call.1} parent=1 // loop_exit
      _
    %436 = vsyncpa [#allocation3], 1
    %s437 = scalar_lea.sflag [#allocation3], 1
    %438 = vsyncpa %s437, 1
    %439 = vsyncpa [#allocation4], 1
    %s440 = scalar_lea.sflag [#allocation4], 1
    %441 = vsyncpa %s440, 1

</llo_original>
